<compile_context>
chip_gen: v5e
topology: v5e:2x2
jax: 0.10.0
libtpu: 0.0.40
codegen_flags: <defaults>
</compile_context>

<pallas_src>
import math

import numpy as np
import jax
import jax.numpy as jnp
from jax import lax
from jax.experimental import pallas as pl
from jax.experimental.pallas import tpu as pltpu


# Vocabulary sizes from the PyTorch module and their (padded) offsets inside
# the combined table.  Offsets are disjoint for all in-range indices.
DAY_SIZE, MONTH_SIZE, YEAR_SIZE = 32, 13, 120
YEAR_OFF, MONTH_OFF, DAY_OFF = 0, 128, 144
V_COMBINED = 256          # padded combined vocab (rows 176..255 are zeros)


def _round_up(x: int, m: int) -> int:
    return ((x + m - 1) // m) * m


def _cdiv(a: int, b: int) -> int:
    return -(-a // b)


def _fixed_embedding_table(c_in: int, d_model: int) -> np.ndarray:
    """Deterministic sinusoidal table, matching FixedEmbedding.__init__."""
    w = np.zeros((c_in, d_model), dtype=np.float32)
    position = np.arange(0, c_in, dtype=np.float32)[:, None]
    div_term = np.exp(
        np.arange(0, d_model, 2, dtype=np.float32) * -(math.log(10000.0) / d_model))
    w[:, 0::2] = np.sin(position * div_term)
    w[:, 1::2] = np.cos(position * div_term)
    return w


def build_temporal_params(d_model: int):
    """Builds the lane-packed combined table.

    Returns (table [P, 256, P*d_model] f32, pack P, raw (year, month, day) tables).
    Block j of the table only fills output lane block j, so a one-hot matmul
    against block j places sub-row j's embedding into its lane slot directly.
    """
    year = _fixed_embedding_table(YEAR_SIZE, d_model)
    month = _fixed_embedding_table(MONTH_SIZE, d_model)
    day = _fixed_embedding_table(DAY_SIZE, d_model)

    combined = np.zeros((V_COMBINED, d_model), dtype=np.float32)
    combined[YEAR_OFF:YEAR_OFF + YEAR_SIZE] = year
    combined[MONTH_OFF:MONTH_OFF + MONTH_SIZE] = month
    combined[DAY_OFF:DAY_OFF + DAY_SIZE] = day

    # Lane-packing factor: pack P rows of width d_model into one >=128-lane row.
    if d_model < 128 and 128 % d_model == 0:
        pack = 128 // d_model
    else:
        pack = 1

    table = np.zeros((pack, V_COMBINED, pack * d_model), dtype=np.float32)
    for j in range(pack):
        table[j, :, j * d_model:(j + 1) * d_model] = combined
    return jnp.asarray(table), pack, (year, month, day)


def temporal_embedding_kernel(idx_ref, table_ref, out_ref):
    # idx_ref:   [tmp, pack*3] int32 — field-offset ids in [0, 256)
    # table_ref: [pack, 256, pack*d_model] f32 (grid-invariant, VMEM resident)
    # out_ref:   [tmp, pack*d_model] f32 (lane-dense, full-width stores)
    idx = idx_ref[...]
    rows = idx.shape[0]
    pack, vocab, _ = table_ref.shape
    # One iota, reused for every sub-row block (hoisted out of the loop).
    iota = lax.broadcasted_iota(jnp.int32, (rows, vocab), 1)
    acc = None
    for j in range(pack):
        # Year/month/day ids are disjoint inside the 256-row combined vocab, so
        # one OR'd one-hot per sub-row gathers (and sums) all three embeddings.
        # Padding ids hit an all-zero row -> contribute 0.
        hit = iota == idx[:, 3 * j + 0:3 * j + 1]
        hit = jnp.logical_or(hit, iota == idx[:, 3 * j + 1:3 * j + 2])
        hit = jnp.logical_or(hit, iota == idx[:, 3 * j + 2:3 * j + 3])
        part = jnp.dot(hit.astype(jnp.float32), table_ref[j],
                       preferred_element_type=jnp.float32)
        acc = part if acc is None else acc + part
    out_ref[...] = acc.astype(out_ref.dtype)


def temporal_embedding(x, table, pack):
    """x: [B, S, 3] int (year, month, day) -> [B, S, d_model] f32."""
    B, S, _ = x.shape
    d_packed = table.shape[2]
    d_model = d_packed // pack
    n = B * S

    idx = x.reshape(n, 3).astype(jnp.int32)
    # Per-field offsets into the combined 256-row table.
    glob = idx + jnp.array([YEAR_OFF, MONTH_OFF, DAY_OFF], dtype=jnp.int32)[None, :]

    # Lane-pack `pack` consecutive rows into one output row.
    n_packed = _cdiv(n, pack)
    # ~1024 original rows (256 packed rows) per grid step; keep >=2 grid steps
    # when there is enough work so both v7x TensorCores can be used.
    if n_packed <= 256:
        tmp = _round_up(n_packed, 8)
    else:
        tmp = min(256, _round_up(_cdiv(n_packed, 2), 8))
    n_packed_pad = _round_up(n_packed, tmp)
    n_pad = n_packed_pad * pack

    # Padding rows point at an all-zero row of the combined table; their
    # outputs are sliced off below (no divisibility assert needed).
    glob = jnp.pad(glob, ((0, n_pad - n), (0, 0)), constant_values=V_COMBINED - 1)

    # Packed layout: packed row p holds original rows p*pack .. p*pack+pack-1,
    # sub-row j's three ids sit at columns 3j..3j+2.
    packed_idx = glob.reshape(n_packed_pad, pack * 3)

    out_packed = pl.pallas_call(
        temporal_embedding_kernel,
        out_shape=jax.ShapeDtypeStruct((n_packed_pad, d_packed), jnp.float32),
        grid_spec=pltpu.PrefetchScalarGridSpec(
            num_scalar_prefetch=0,
            grid=(n_packed_pad // tmp,),
            in_specs=[
                pl.BlockSpec((tmp, pack * 3), lambda i: (i, 0)),
                # Grid-invariant: table DMA'd once and kept resident in VMEM.
                pl.BlockSpec(table.shape, lambda i: (0, 0, 0)),
            ],
            out_specs=pl.BlockSpec((tmp, d_packed), lambda i: (i, 0)),
        ),
        compiler_params=pltpu.CompilerParams(
            dimension_semantics=("parallel",)),
    )(packed_idx, table)

    out = out_packed.reshape(n_packed_pad * pack, d_model)[:n]
    return out.reshape(B, S, d_model)


if __name__ == "__main__":
    d_model = 32
    B, S = 2, 8

    table, pack, (year_np, month_np, day_np) = build_temporal_params(d_model)

    key = jax.random.PRNGKey(0)
    k_y, k_m, k_d = jax.random.split(key, 3)
    year_idx = jax.random.randint(k_y, (B, S), 0, YEAR_SIZE, dtype=jnp.int32)
    month_idx = jax.random.randint(k_m, (B, S), 0, MONTH_SIZE, dtype=jnp.int32)
    day_idx = jax.random.randint(k_d, (B, S), 0, DAY_SIZE, dtype=jnp.int32)
    x = jnp.stack([year_idx, month_idx, day_idx], axis=-1)   # [B, S, 3]

    out = temporal_embedding(x, table, pack)
    out = jax.block_until_ready(out)

    # Pure-JAX reference (same semantics as the PyTorch forward).
    ref = (jnp.take(jnp.asarray(day_np), day_idx, axis=0)
           + jnp.take(jnp.asarray(month_np), month_idx, axis=0)
           + jnp.take(jnp.asarray(year_np), year_idx, axis=0))
    np.testing.assert_allclose(np.asarray(out), np.asarray(ref), rtol=1e-5, atol=1e-5)

    print("KERNEL_OK")
</pallas_src>

<mosaic_0001>
module attributes {stable_mosaic.version = 11 : i64} {
  func.func @temporal_embedding_kernel(%arg0: i32, %arg1: memref<8x12xi32, #tpu.memory_space<vmem>>, %arg2: memref<4x256x128xf32, #tpu.memory_space<vmem>>, %arg3: memref<8x128xf32, #tpu.memory_space<vmem>>) attributes {dimension_semantics = [#tpu.dimension_semantics<parallel>], iteration_bounds = array<i64: 1>, scalar_prefetch = 0 : i64, scratch_operands = 0 : i64, tpu.core_type = #tpu.core_type<tc>, window_params = [{transform_indices = @transform_0, window_bounds = array<i64: 8, 12>}, {pipeline_mode = #tpu.pipeline_mode<synchronous>, transform_indices = @transform_1, window_bounds = array<i64: 4, 256, 128>}, {transform_indices = @transform_2, window_bounds = array<i64: 8, 128>}]} {
    %c0 = arith.constant 0 : index
    %c0_0 = arith.constant 0 : index
    %0 = vector.load %arg1[%c0, %c0_0] : memref<8x12xi32, #tpu.memory_space<vmem>>, vector<8x12xi32>
    %1 = tpu.iota {dimensions = array<i32: 1>} : vector<8x256xi32>
    %2 = vector.extract_strided_slice %0 {offsets = [0, 0], sizes = [8, 1], strides = [1, 1]} : vector<8x12xi32> to vector<8x1xi32>
    %3 = vector.broadcast %2 : vector<8x1xi32> to vector<8x256xi32>
    %4 = arith.cmpi eq, %1, %3 : vector<8x256xi32>
    %5 = vector.extract_strided_slice %0 {offsets = [0, 1], sizes = [8, 1], strides = [1, 1]} : vector<8x12xi32> to vector<8x1xi32>
    %6 = vector.broadcast %5 : vector<8x1xi32> to vector<8x256xi32>
    %7 = arith.cmpi eq, %1, %6 : vector<8x256xi32>
    %8 = arith.ori %4, %7 : vector<8x256xi1>
    %9 = vector.extract_strided_slice %0 {offsets = [0, 2], sizes = [8, 1], strides = [1, 1]} : vector<8x12xi32> to vector<8x1xi32>
    %10 = vector.broadcast %9 : vector<8x1xi32> to vector<8x256xi32>
    %11 = arith.cmpi eq, %1, %10 : vector<8x256xi32>
    %12 = arith.ori %8, %11 : vector<8x256xi1>
    %13 = arith.extui %12 : vector<8x256xi1> to vector<8x256xi32>
    %14 = arith.sitofp %13 : vector<8x256xi32> to vector<8x256xf32>
    %c0_1 = arith.constant 0 : index
    %c0_2 = arith.constant 0 : index
    %c0_3 = arith.constant 0 : index
    %15 = vector.load %arg2[%c0_1, %c0_2, %c0_3] : memref<4x256x128xf32, #tpu.memory_space<vmem>>, vector<1x256x128xf32>
    %16 = vector.shape_cast %15 : vector<1x256x128xf32> to vector<256x128xf32>
    %cst = arith.constant dense<0.000000e+00> : vector<8x128xf32>
    %17 = tpu.matmul %14, %16, %cst {dimension_numbers = #tpu.dot_dimension_numbers<[1], [0], [0], [1], [0, 0, 1, 1], [], []>} : vector<8x256xf32>, vector<256x128xf32>, vector<8x128xf32> -> vector<8x128xf32>
    %18 = vector.extract_strided_slice %0 {offsets = [0, 3], sizes = [8, 1], strides = [1, 1]} : vector<8x12xi32> to vector<8x1xi32>
    %19 = vector.broadcast %18 : vector<8x1xi32> to vector<8x256xi32>
    %20 = arith.cmpi eq, %1, %19 : vector<8x256xi32>
    %21 = vector.extract_strided_slice %0 {offsets = [0, 4], sizes = [8, 1], strides = [1, 1]} : vector<8x12xi32> to vector<8x1xi32>
    %22 = vector.broadcast %21 : vector<8x1xi32> to vector<8x256xi32>
    %23 = arith.cmpi eq, %1, %22 : vector<8x256xi32>
    %24 = arith.ori %20, %23 : vector<8x256xi1>
    %25 = vector.extract_strided_slice %0 {offsets = [0, 5], sizes = [8, 1], strides = [1, 1]} : vector<8x12xi32> to vector<8x1xi32>
    %26 = vector.broadcast %25 : vector<8x1xi32> to vector<8x256xi32>
    %27 = arith.cmpi eq, %1, %26 : vector<8x256xi32>
    %28 = arith.ori %24, %27 : vector<8x256xi1>
    %29 = arith.extui %28 : vector<8x256xi1> to vector<8x256xi32>
    %30 = arith.sitofp %29 : vector<8x256xi32> to vector<8x256xf32>
    %c1 = arith.constant 1 : index
    %c0_4 = arith.constant 0 : index
    %c0_5 = arith.constant 0 : index
    %31 = vector.load %arg2[%c1, %c0_4, %c0_5] : memref<4x256x128xf32, #tpu.memory_space<vmem>>, vector<1x256x128xf32>
    %32 = vector.shape_cast %31 : vector<1x256x128xf32> to vector<256x128xf32>
    %cst_6 = arith.constant dense<0.000000e+00> : vector<8x128xf32>
    %33 = tpu.matmul %30, %32, %cst_6 {dimension_numbers = #tpu.dot_dimension_numbers<[1], [0], [0], [1], [0, 0, 1, 1], [], []>} : vector<8x256xf32>, vector<256x128xf32>, vector<8x128xf32> -> vector<8x128xf32>
    %34 = arith.addf %17, %33 : vector<8x128xf32>
    %35 = vector.extract_strided_slice %0 {offsets = [0, 6], sizes = [8, 1], strides = [1, 1]} : vector<8x12xi32> to vector<8x1xi32>
    %36 = vector.broadcast %35 : vector<8x1xi32> to vector<8x256xi32>
    %37 = arith.cmpi eq, %1, %36 : vector<8x256xi32>
    %38 = vector.extract_strided_slice %0 {offsets = [0, 7], sizes = [8, 1], strides = [1, 1]} : vector<8x12xi32> to vector<8x1xi32>
    %39 = vector.broadcast %38 : vector<8x1xi32> to vector<8x256xi32>
    %40 = arith.cmpi eq, %1, %39 : vector<8x256xi32>
    %41 = arith.ori %37, %40 : vector<8x256xi1>
    %42 = vector.extract_strided_slice %0 {offsets = [0, 8], sizes = [8, 1], strides = [1, 1]} : vector<8x12xi32> to vector<8x1xi32>
    %43 = vector.broadcast %42 : vector<8x1xi32> to vector<8x256xi32>
    %44 = arith.cmpi eq, %1, %43 : vector<8x256xi32>
    %45 = arith.ori %41, %44 : vector<8x256xi1>
    %46 = arith.extui %45 : vector<8x256xi1> to vector<8x256xi32>
    %47 = arith.sitofp %46 : vector<8x256xi32> to vector<8x256xf32>
    %c2 = arith.constant 2 : index
    %c0_7 = arith.constant 0 : index
    %c0_8 = arith.constant 0 : index
    %48 = vector.load %arg2[%c2, %c0_7, %c0_8] : memref<4x256x128xf32, #tpu.memory_space<vmem>>, vector<1x256x128xf32>
    %49 = vector.shape_cast %48 : vector<1x256x128xf32> to vector<256x128xf32>
    %cst_9 = arith.constant dense<0.000000e+00> : vector<8x128xf32>
    %50 = tpu.matmul %47, %49, %cst_9 {dimension_numbers = #tpu.dot_dimension_numbers<[1], [0], [0], [1], [0, 0, 1, 1], [], []>} : vector<8x256xf32>, vector<256x128xf32>, vector<8x128xf32> -> vector<8x128xf32>
    %51 = arith.addf %34, %50 : vector<8x128xf32>
    %52 = vector.extract_strided_slice %0 {offsets = [0, 9], sizes = [8, 1], strides = [1, 1]} : vector<8x12xi32> to vector<8x1xi32>
    %53 = vector.broadcast %52 : vector<8x1xi32> to vector<8x256xi32>
    %54 = arith.cmpi eq, %1, %53 : vector<8x256xi32>
    %55 = vector.extract_strided_slice %0 {offsets = [0, 10], sizes = [8, 1], strides = [1, 1]} : vector<8x12xi32> to vector<8x1xi32>
    %56 = vector.broadcast %55 : vector<8x1xi32> to vector<8x256xi32>
    %57 = arith.cmpi eq, %1, %56 : vector<8x256xi32>
    %58 = arith.ori %54, %57 : vector<8x256xi1>
    %59 = vector.extract_strided_slice %0 {offsets = [0, 11], sizes = [8, 1], strides = [1, 1]} : vector<8x12xi32> to vector<8x1xi32>
    %60 = vector.broadcast %59 : vector<8x1xi32> to vector<8x256xi32>
    %61 = arith.cmpi eq, %1, %60 : vector<8x256xi32>
    %62 = arith.ori %58, %61 : vector<8x256xi1>
    %63 = arith.extui %62 : vector<8x256xi1> to vector<8x256xi32>
    %64 = arith.sitofp %63 : vector<8x256xi32> to vector<8x256xf32>
    %c3 = arith.constant 3 : index
    %c0_10 = arith.constant 0 : index
    %c0_11 = arith.constant 0 : index
    %65 = vector.load %arg2[%c3, %c0_10, %c0_11] : memref<4x256x128xf32, #tpu.memory_space<vmem>>, vector<1x256x128xf32>
    %66 = vector.shape_cast %65 : vector<1x256x128xf32> to vector<256x128xf32>
    %cst_12 = arith.constant dense<0.000000e+00> : vector<8x128xf32>
    %67 = tpu.matmul %64, %66, %cst_12 {dimension_numbers = #tpu.dot_dimension_numbers<[1], [0], [0], [1], [0, 0, 1, 1], [], []>} : vector<8x256xf32>, vector<256x128xf32>, vector<8x128xf32> -> vector<8x128xf32>
    %68 = arith.addf %51, %67 : vector<8x128xf32>
    %c0_13 = arith.constant 0 : index
    %c0_14 = arith.constant 0 : index
    %69 = vector.load %arg3[%c0_13, %c0_14] : memref<8x128xf32, #tpu.memory_space<vmem>>, vector<8x128xf32>
    tpu.vector_store %arg3[%c0_13, %c0_14], %68 {strides = array<i32>} : memref<8x128xf32, #tpu.memory_space<vmem>>, vector<8x128xf32>,
    return
  }
  func.func @transform_0(%arg0: i32) -> (i32, i32) {
    %c0_i32 = arith.constant 0 : i32
    %c0_i32_0 = arith.constant 0 : i32
    return %arg0, %c0_i32 : i32, i32
  }
  func.func @transform_1(%arg0: i32) -> (i32, i32, i32) {
    %c0_i32 = arith.constant 0 : i32
    %c0_i32_0 = arith.constant 0 : i32
    %c0_i32_1 = arith.constant 0 : i32
    %c0_i32_2 = arith.constant 0 : i32
    return %c0_i32, %c0_i32_0, %c0_i32_1 : i32, i32, i32
  }
  func.func @transform_2(%arg0: i32) -> (i32, i32) {
    %c0_i32 = arith.constant 0 : i32
    %c0_i32_0 = arith.constant 0 : i32
    return %arg0, %c0_i32 : i32, i32
  }
}

</mosaic_0001>

<llo_original>
// kernel: tpu_custom_call.1
$region0: #{tpu_custom_call.1}
  #allocation0 [shape = 'u32[]', space=smem, size = 0x4, offset = 0x4, fixed_abs, tag = 'smem constant byte address 0x4 - core index']
  #allocation1 [shape = 'u32[72,128]{1,0:T(1,128)}', space=vmem, size = 0x9000, scoped, tag = 'internal scratch']
  %s0 = inlined_call_operand.hbm [shape: s32[8,12], index: 0, kind: input, shape index: {}]
  %s1 = inlined_call_operand.hbm [shape: f32[4,256,128], index: 1, kind: input, shape index: {}]
  %s2 = inlined_call_operand.hbm [shape: f32[8,128], index: 2, kind: output, shape index: {}]
  %s3 = sld [smem:[#allocation0]]
  $region26: #{tpu_custom_call.1} parent=0
    _
  %s5 = ssub.s32 1, %s3
  %s6 = scalar_select 0, %s5, %s3
  $region1: #{tpu_custom_call.1} parent=0
    #allocation2 [shape = 'u8[4096]{0}', space=vmem, size = 0x1000, scoped, tag = 'input window, operand 0, single buffered']
    #allocation3 [shape = 's32[1]{0}', space=sflag, size = 0x4, scoped, tag = 'scoped memory for tpu_custom_call.1']
    #allocation4 [shape = 's32[1]{0}', space=sflag, size = 0x4, scoped, tag = 'scoped memory for tpu_custom_call.1']
    #allocation5 [shape = 'u8[524288]{0}', space=vmem, size = 0x80000, scoped, tag = 'input window, operand 1, single buffered']
    #allocation6 [shape = 's32[1]{0}', space=sflag, size = 0x4, scoped, tag = 'scoped memory for tpu_custom_call.1']
    #allocation7 [shape = 'u8[4096]{0}', space=vmem, size = 0x1000, scoped, tag = 'output window, operand 0, single buffered']
    %7 = vsyncpa [#allocation3], 0
    %8 = vsyncpa [#allocation6], 0
    %9 = vsyncpa [#allocation4], 0
    // Predicated region
    $region2: #{tpu_custom_call.1} parent=1 // pred_check
      _
    $region3: #{tpu_custom_call.1} parent=1 // pred_check_branch
      %11 = sbr.rel (0) target = $region5
    $region4: #{tpu_custom_call.1} parent=1 // pred_region
      %13 = vsyncadd [#allocation3], 0
      %s15 = sshll.u32 %s0, 4
      %s16 = int_to_ptr.hbm [resolvable:$true] %s15
      %s17 = sshll.u32 [#allocation2], 4
      %s18 = int_to_ptr.vmem [resolvable:$true] %s17
      %20 = dma.hbm_to_vmem [thread:$0]  %s16, 128, %s18, [#allocation3]
    $region5: #{tpu_custom_call.1} parent=1 // pred_fallthru
      _
    // Predicated region
    $region6: #{tpu_custom_call.1} parent=1 // pred_check
      _
    $region7: #{tpu_custom_call.1} parent=1 // pred_check_branch
      %22 = sbr.rel (0) target = $region9
    $region8: #{tpu_custom_call.1} parent=1 // pred_region
      %24 = vsyncadd [#allocation6], 0
      %s25 = sshll.u32 %s1, 4
      %s26 = int_to_ptr.hbm [resolvable:$true] %s25
      %s27 = sshll.u32 [#allocation5], 4
      %s28 = int_to_ptr.vmem [resolvable:$true] %s27
      %33 = dma.hbm_to_vmem [thread:$0]  %s26, 16384, %s28, [#allocation6], 128, 128, 8
    $region9: #{tpu_custom_call.1} parent=1 // pred_fallthru
      _
    // Predicated region
    $region10: #{tpu_custom_call.1} parent=1 // pred_check
      _
    $region11: #{tpu_custom_call.1} parent=1 // pred_check_branch
      %35 = sbr.rel (0) target = $region13
    $region12: #{tpu_custom_call.1} parent=1 // pred_region
      %37 = dma.done [#allocation3], 128
    $region13: #{tpu_custom_call.1} parent=1 // pred_fallthru
      _
    // Predicated region
    $region14: #{tpu_custom_call.1} parent=1 // pred_check
      _
    $region15: #{tpu_custom_call.1} parent=1 // pred_check_branch
      %39 = sbr.rel (0) target = $region17
    $region16: #{tpu_custom_call.1} parent=1 // pred_region
      %41 = dma.done [#allocation6], 16384
    $region17: #{tpu_custom_call.1} parent=1 // pred_fallthru
      _
    %v42 = vld [vmem:[#allocation2] sm:$0xff]
    %v43 = vlaneseq
    %v44 = vand.u32 %v43, 127
    %v45 = vadd.s32 %v44, 128
    %46 = vset.pattern.permute.xlu0 0
    %47 = vperm.xlu0 %46, %v42
    %v48 = vpop.permute.xlu0 %47
    %vm49 = vcmp.eq.s32.totalorder %v44, %v48
    %vm50 = vcmp.eq.s32.totalorder %v45, %v48
    %51 = vset.pattern.permute.xlu0 1
    %52 = vperm.xlu0 %51, %v42
    %v53 = vpop.permute.xlu0 %52
    %vm54 = vcmp.eq.s32.totalorder %v44, %v53
    %vm55 = vcmp.eq.s32.totalorder %v45, %v53
    %vm56 = vmor %vm49, %vm54
    %vm57 = vmor %vm50, %vm55
    %58 = vset.pattern.permute.xlu0 2
    %59 = vperm.xlu0 %58, %v42
    %v60 = vpop.permute.xlu0 %59
    %vm61 = vcmp.eq.s32.totalorder %v44, %v60
    %vm62 = vcmp.eq.s32.totalorder %v45, %v60
    %vm63 = vmor %vm56, %vm61
    %vm64 = vmor %vm57, %vm62
    %v65 = vsel %vm63, 1, 0
    %v66 = vsel %vm64, 1, 0
    %v67 = vcvt.s32.f32 %v65
    %v68 = vcvt.s32.f32 %v66
    %v69 = vld [vmem:[#allocation5] sm:$0xff]
    %v70 = vld [vmem:[#allocation5 + $0x8] sm:$0xff]
    %v71 = vld [vmem:[#allocation5 + $0x10] sm:$0xff]
    %v72 = vld [vmem:[#allocation5 + $0x18] sm:$0xff]
    %v73 = vld [vmem:[#allocation5 + $0x20] sm:$0xff]
    %v74 = vld [vmem:[#allocation5 + $0x28] sm:$0xff]
    %v75 = vld [vmem:[#allocation5 + $0x30] sm:$0xff]
    %v76 = vld [vmem:[#allocation5 + $0x38] sm:$0xff]
    %v77 = vld [vmem:[#allocation5 + $0x40] sm:$0xff]
    %v78 = vld [vmem:[#allocation5 + $0x48] sm:$0xff]
    %v79 = vld [vmem:[#allocation5 + $0x50] sm:$0xff]
    %v80 = vld [vmem:[#allocation5 + $0x58] sm:$0xff]
    %v81 = vld [vmem:[#allocation5 + $0x60] sm:$0xff]
    %v82 = vld [vmem:[#allocation5 + $0x68] sm:$0xff]
    %v83 = vld [vmem:[#allocation5 + $0x70] sm:$0xff]
    %v84 = vld [vmem:[#allocation5 + $0x78] sm:$0xff]
    %v85 = vld [vmem:[#allocation5 + $0x80] sm:$0xff]
    %v86 = vld [vmem:[#allocation5 + $0x88] sm:$0xff]
    %v87 = vld [vmem:[#allocation5 + $0x90] sm:$0xff]
    %v88 = vld [vmem:[#allocation5 + $0x98] sm:$0xff]
    %v89 = vld [vmem:[#allocation5 + $0xa0] sm:$0xff]
    %v90 = vld [vmem:[#allocation5 + $0xa8] sm:$0xff]
    %v91 = vld [vmem:[#allocation5 + $0xb0] sm:$0xff]
    %v92 = vld [vmem:[#allocation5 + $0xb8] sm:$0xff]
    %v93 = vld [vmem:[#allocation5 + $0xc0] sm:$0xff]
    %v94 = vld [vmem:[#allocation5 + $0xc8] sm:$0xff]
    %v95 = vld [vmem:[#allocation5 + $0xd0] sm:$0xff]
    %v96 = vld [vmem:[#allocation5 + $0xd8] sm:$0xff]
    %v97 = vld [vmem:[#allocation5 + $0xe0] sm:$0xff]
    %v98 = vld [vmem:[#allocation5 + $0xe8] sm:$0xff]
    %v99 = vld [vmem:[#allocation5 + $0xf0] sm:$0xff]
    %v100 = vld [vmem:[#allocation5 + $0xf8] sm:$0xff]
    %101 = vset.pattern.permute.xlu0 3
    %102 = vperm.xlu0 %101, %v42
    %v103 = vpop.permute.xlu0 %102
    %vm104 = vcmp.eq.s32.totalorder %v44, %v103
    %vm105 = vcmp.eq.s32.totalorder %v45, %v103
    %106 = vset.pattern.permute.xlu0 4
    %107 = vperm.xlu0 %106, %v42
    %v108 = vpop.permute.xlu0 %107
    %vm109 = vcmp.eq.s32.totalorder %v44, %v108
    %vm110 = vcmp.eq.s32.totalorder %v45, %v108
    %vm111 = vmor %vm104, %vm109
    %vm112 = vmor %vm105, %vm110
    %113 = vset.pattern.permute.xlu0 5
    %114 = vperm.xlu0 %113, %v42
    %v115 = vpop.permute.xlu0 %114
    %vm116 = vcmp.eq.s32.totalorder %v44, %v115
    %vm117 = vcmp.eq.s32.totalorder %v45, %v115
    %vm118 = vmor %vm111, %vm116
    %vm119 = vmor %vm112, %vm117
    %v120 = vsel %vm118, 1, 0
    %v121 = vsel %vm119, 1, 0
    %v122 = vcvt.s32.f32 %v120
    %v123 = vcvt.s32.f32 %v121
    %s124 = scalar_lea.vmem [#allocation5], 256
    %v125 = vld [vmem:[%s124] sm:$0xff]
    %v126 = vld [vmem:[%s124 + $0x8] sm:$0xff]
    %v127 = vld [vmem:[%s124 + $0x10] sm:$0xff]
    %v128 = vld [vmem:[%s124 + $0x18] sm:$0xff]
    %v129 = vld [vmem:[%s124 + $0x20] sm:$0xff]
    %v130 = vld [vmem:[%s124 + $0x28] sm:$0xff]
    %v131 = vld [vmem:[%s124 + $0x30] sm:$0xff]
    %v132 = vld [vmem:[%s124 + $0x38] sm:$0xff]
    %v133 = vld [vmem:[%s124 + $0x40] sm:$0xff]
    %v134 = vld [vmem:[%s124 + $0x48] sm:$0xff]
    %v135 = vld [vmem:[%s124 + $0x50] sm:$0xff]
    %v136 = vld [vmem:[%s124 + $0x58] sm:$0xff]
    %v137 = vld [vmem:[%s124 + $0x60] sm:$0xff]
    %v138 = vld [vmem:[%s124 + $0x68] sm:$0xff]
    %v139 = vld [vmem:[%s124 + $0x70] sm:$0xff]
    %v140 = vld [vmem:[%s124 + $0x78] sm:$0xff]
    %v141 = vld [vmem:[%s124 + $0x80] sm:$0xff]
    %v142 = vld [vmem:[%s124 + $0x88] sm:$0xff]
    %v143 = vld [vmem:[%s124 + $0x90] sm:$0xff]
    %v144 = vld [vmem:[%s124 + $0x98] sm:$0xff]
    %v145 = vld [vmem:[%s124 + $0xa0] sm:$0xff]
    %v146 = vld [vmem:[%s124 + $0xa8] sm:$0xff]
    %v147 = vld [vmem:[%s124 + $0xb0] sm:$0xff]
    %v148 = vld [vmem:[%s124 + $0xb8] sm:$0xff]
    %v149 = vld [vmem:[%s124 + $0xc0] sm:$0xff]
    %v150 = vld [vmem:[%s124 + $0xc8] sm:$0xff]
    %v151 = vld [vmem:[%s124 + $0xd0] sm:$0xff]
    %v152 = vld [vmem:[%s124 + $0xd8] sm:$0xff]
    %v153 = vld [vmem:[%s124 + $0xe0] sm:$0xff]
    %v154 = vld [vmem:[%s124 + $0xe8] sm:$0xff]
    %v155 = vld [vmem:[%s124 + $0xf0] sm:$0xff]
    %v156 = vld [vmem:[%s124 + $0xf8] sm:$0xff]
    %157 = vmatpush.msra.mxu0 %v140
    %158 = vmatpush.msra.mxu0 %v139
    %159 = vmatpush.msra.mxu0 %v138
    %160 = vmatpush.msra.mxu0 %v137
    %161 = vmatpush.msra.mxu0 %v136
    %162 = vmatpush.msra.mxu0 %v135
    %163 = vmatpush.msra.mxu0 %v134
    %164 = vmatpush.msra.mxu0 %v133
    %165 = vmatpush.msra.mxu0 %v132
    %166 = vmatpush.msra.mxu0 %v131
    %167 = vmatpush.msra.mxu0 %v130
    %168 = vmatpush.msra.mxu0 %v129
    %169 = vmatpush.msra.mxu0 %v128
    %170 = vmatpush.msra.mxu0 %v127
    %171 = vmatpush.msra.mxu0 %v126
    %172 = vmatpush.msra.mxu0 %v125
    %173 = vmatmul.f32.gmra.mxu0 %v122
    %v174 = vpop.f32.mrf.mxu0
    %v175 = vadd.f32 0.0, %v174
    %176 = vdwg.mxu0
    %177 = vmatpush.msra.mxu0 %v156
    %178 = vmatpush.msra.mxu0 %v155
    %179 = vmatpush.msra.mxu0 %v154
    %180 = vmatpush.msra.mxu0 %v153
    %181 = vmatpush.msra.mxu0 %v152
    %182 = vmatpush.msra.mxu0 %v151
    %183 = vmatpush.msra.mxu0 %v150
    %184 = vmatpush.msra.mxu0 %v149
    %185 = vmatpush.msra.mxu0 %v148
    %186 = vmatpush.msra.mxu0 %v147
    %187 = vmatpush.msra.mxu0 %v146
    %188 = vmatpush.msra.mxu0 %v145
    %189 = vmatpush.msra.mxu0 %v144
    %190 = vmatpush.msra.mxu0 %v143
    %191 = vmatpush.msra.mxu0 %v142
    %192 = vmatpush.msra.mxu0 %v141
    %193 = vmatmul.f32.gmra.mxu0 %v123
    %v194 = vpop.f32.mrf.mxu0
    %v195 = vadd.f32 %v175, %v194
    %196 = vdwg.mxu0
    %197 = vmatpush.msra.mxu0 %v84
    %198 = vmatpush.msra.mxu0 %v83
    %199 = vmatpush.msra.mxu0 %v82
    %200 = vmatpush.msra.mxu0 %v81
    %201 = vmatpush.msra.mxu0 %v80
    %202 = vmatpush.msra.mxu0 %v79
    %203 = vmatpush.msra.mxu0 %v78
    %204 = vmatpush.msra.mxu0 %v77
    %205 = vmatpush.msra.mxu0 %v76
    %206 = vmatpush.msra.mxu0 %v75
    %207 = vmatpush.msra.mxu0 %v74
    %208 = vmatpush.msra.mxu0 %v73
    %209 = vmatpush.msra.mxu0 %v72
    %210 = vmatpush.msra.mxu0 %v71
    %211 = vmatpush.msra.mxu0 %v70
    %212 = vmatpush.msra.mxu0 %v69
    %213 = vmatmul.f32.gmra.mxu0 %v67
    %v214 = vpop.f32.mrf.mxu0
    %v215 = vadd.f32 %v195, %v214
    %216 = vdwg.mxu0
    %217 = vmatpush.msra.mxu0 %v100
    %218 = vmatpush.msra.mxu0 %v99
    %219 = vmatpush.msra.mxu0 %v98
    %220 = vmatpush.msra.mxu0 %v97
    %221 = vmatpush.msra.mxu0 %v96
    %222 = vmatpush.msra.mxu0 %v95
    %223 = vmatpush.msra.mxu0 %v94
    %224 = vmatpush.msra.mxu0 %v93
    %225 = vmatpush.msra.mxu0 %v92
    %226 = vmatpush.msra.mxu0 %v91
    %227 = vmatpush.msra.mxu0 %v90
    %228 = vmatpush.msra.mxu0 %v89
    %229 = vmatpush.msra.mxu0 %v88
    %230 = vmatpush.msra.mxu0 %v87
    %231 = vmatpush.msra.mxu0 %v86
    %232 = vmatpush.msra.mxu0 %v85
    %233 = vmatmul.f32.gmra.mxu0 %v68
    %v234 = vpop.f32.mrf.mxu0
    %v235 = vadd.f32 %v215, %v234
    %236 = vdwg.mxu0
    %237 = vset.pattern.permute.xlu0 6
    %238 = vperm.xlu0 %237, %v42
    %v239 = vpop.permute.xlu0 %238
    %vm240 = vcmp.eq.s32.totalorder %v44, %v239
    %vm241 = vcmp.eq.s32.totalorder %v45, %v239
    %242 = vset.pattern.permute.xlu0 7
    %243 = vperm.xlu0 %242, %v42
    %v244 = vpop.permute.xlu0 %243
    %vm245 = vcmp.eq.s32.totalorder %v44, %v244
    %vm246 = vcmp.eq.s32.totalorder %v45, %v244
    %vm247 = vmor %vm240, %vm245
    %vm248 = vmor %vm241, %vm246
    %249 = vset.pattern.permute.xlu0 8
    %250 = vperm.xlu0 %249, %v42
    %v251 = vpop.permute.xlu0 %250
    %vm252 = vcmp.eq.s32.totalorder %v44, %v251
    %vm253 = vcmp.eq.s32.totalorder %v45, %v251
    %vm254 = vmor %vm247, %vm252
    %vm255 = vmor %vm248, %vm253
    %v256 = vsel %vm254, 1, 0
    %v257 = vsel %vm255, 1, 0
    %v258 = vcvt.s32.f32 %v256
    %v259 = vcvt.s32.f32 %v257
    %s260 = scalar_lea.vmem [#allocation5], 512
    %v261 = vld [vmem:[%s260] sm:$0xff]
    %v262 = vld [vmem:[%s260 + $0x8] sm:$0xff]
    %v263 = vld [vmem:[%s260 + $0x10] sm:$0xff]
    %v264 = vld [vmem:[%s260 + $0x18] sm:$0xff]
    %v265 = vld [vmem:[%s260 + $0x20] sm:$0xff]
    %v266 = vld [vmem:[%s260 + $0x28] sm:$0xff]
    %v267 = vld [vmem:[%s260 + $0x30] sm:$0xff]
    %v268 = vld [vmem:[%s260 + $0x38] sm:$0xff]
    %v269 = vld [vmem:[%s260 + $0x40] sm:$0xff]
    %v270 = vld [vmem:[%s260 + $0x48] sm:$0xff]
    %v271 = vld [vmem:[%s260 + $0x50] sm:$0xff]
    %v272 = vld [vmem:[%s260 + $0x58] sm:$0xff]
    %v273 = vld [vmem:[%s260 + $0x60] sm:$0xff]
    %v274 = vld [vmem:[%s260 + $0x68] sm:$0xff]
    %v275 = vld [vmem:[%s260 + $0x70] sm:$0xff]
    %v276 = vld [vmem:[%s260 + $0x78] sm:$0xff]
    %v277 = vld [vmem:[%s260 + $0x80] sm:$0xff]
    %v278 = vld [vmem:[%s260 + $0x88] sm:$0xff]
    %v279 = vld [vmem:[%s260 + $0x90] sm:$0xff]
    %v280 = vld [vmem:[%s260 + $0x98] sm:$0xff]
    %v281 = vld [vmem:[%s260 + $0xa0] sm:$0xff]
    %v282 = vld [vmem:[%s260 + $0xa8] sm:$0xff]
    %v283 = vld [vmem:[%s260 + $0xb0] sm:$0xff]
    %v284 = vld [vmem:[%s260 + $0xb8] sm:$0xff]
    %v285 = vld [vmem:[%s260 + $0xc0] sm:$0xff]
    %v286 = vld [vmem:[%s260 + $0xc8] sm:$0xff]
    %v287 = vld [vmem:[%s260 + $0xd0] sm:$0xff]
    %v288 = vld [vmem:[%s260 + $0xd8] sm:$0xff]
    %v289 = vld [vmem:[%s260 + $0xe0] sm:$0xff]
    %v290 = vld [vmem:[%s260 + $0xe8] sm:$0xff]
    %v291 = vld [vmem:[%s260 + $0xf0] sm:$0xff]
    %v292 = vld [vmem:[%s260 + $0xf8] sm:$0xff]
    %293 = vmatpush.msra.mxu0 %v276
    %294 = vmatpush.msra.mxu0 %v275
    %295 = vmatpush.msra.mxu0 %v274
    %296 = vmatpush.msra.mxu0 %v273
    %297 = vmatpush.msra.mxu0 %v272
    %298 = vmatpush.msra.mxu0 %v271
    %299 = vmatpush.msra.mxu0 %v270
    %300 = vmatpush.msra.mxu0 %v269
    %301 = vmatpush.msra.mxu0 %v268
    %302 = vmatpush.msra.mxu0 %v267
    %303 = vmatpush.msra.mxu0 %v266
    %304 = vmatpush.msra.mxu0 %v265
    %305 = vmatpush.msra.mxu0 %v264
    %306 = vmatpush.msra.mxu0 %v263
    %307 = vmatpush.msra.mxu0 %v262
    %308 = vmatpush.msra.mxu0 %v261
    %309 = vmatmul.f32.gmra.mxu0 %v258
    %v310 = vpop.f32.mrf.mxu0
    %v311 = vadd.f32 0.0, %v310
    %312 = vdwg.mxu0
    %313 = vmatpush.msra.mxu0 %v292
    %314 = vmatpush.msra.mxu0 %v291
    %315 = vmatpush.msra.mxu0 %v290
    %316 = vmatpush.msra.mxu0 %v289
    %317 = vmatpush.msra.mxu0 %v288
    %318 = vmatpush.msra.mxu0 %v287
    %319 = vmatpush.msra.mxu0 %v286
    %320 = vmatpush.msra.mxu0 %v285
    %321 = vmatpush.msra.mxu0 %v284
    %322 = vmatpush.msra.mxu0 %v283
    %323 = vmatpush.msra.mxu0 %v282
    %324 = vmatpush.msra.mxu0 %v281
    %325 = vmatpush.msra.mxu0 %v280
    %326 = vmatpush.msra.mxu0 %v279
    %327 = vmatpush.msra.mxu0 %v278
    %328 = vmatpush.msra.mxu0 %v277
    %329 = vmatmul.f32.gmra.mxu0 %v259
    %v330 = vpop.f32.mrf.mxu0
    %v331 = vadd.f32 %v311, %v330
    %332 = vdwg.mxu0
    %v333 = vadd.f32 %v235, %v331
    %334 = vset.pattern.permute.xlu0 9
    %335 = vperm.xlu0 %334, %v42
    %v336 = vpop.permute.xlu0 %335
    %vm337 = vcmp.eq.s32.totalorder %v44, %v336
    %vm338 = vcmp.eq.s32.totalorder %v45, %v336
    %339 = vset.pattern.permute.xlu0 10
    %340 = vperm.xlu0 %339, %v42
    %v341 = vpop.permute.xlu0 %340
    %vm342 = vcmp.eq.s32.totalorder %v44, %v341
    %vm343 = vcmp.eq.s32.totalorder %v45, %v341
    %vm344 = vmor %vm337, %vm342
    %vm345 = vmor %vm338, %vm343
    %346 = vset.pattern.permute.xlu0 11
    %347 = vperm.xlu0 %346, %v42
    %v348 = vpop.permute.xlu0 %347
    %vm349 = vcmp.eq.s32.totalorder %v44, %v348
    %vm350 = vcmp.eq.s32.totalorder %v45, %v348
    %vm351 = vmor %vm344, %vm349
    %vm352 = vmor %vm345, %vm350
    %v353 = vsel %vm351, 1, 0
    %v354 = vsel %vm352, 1, 0
    %v355 = vcvt.s32.f32 %v353
    %v356 = vcvt.s32.f32 %v354
    %s357 = scalar_lea.vmem [#allocation5], 768
    %v358 = vld [vmem:[%s357] sm:$0xff]
    %v359 = vld [vmem:[%s357 + $0x8] sm:$0xff]
    %v360 = vld [vmem:[%s357 + $0x10] sm:$0xff]
    %v361 = vld [vmem:[%s357 + $0x18] sm:$0xff]
    %v362 = vld [vmem:[%s357 + $0x20] sm:$0xff]
    %v363 = vld [vmem:[%s357 + $0x28] sm:$0xff]
    %v364 = vld [vmem:[%s357 + $0x30] sm:$0xff]
    %v365 = vld [vmem:[%s357 + $0x38] sm:$0xff]
    %v366 = vld [vmem:[%s357 + $0x40] sm:$0xff]
    %v367 = vld [vmem:[%s357 + $0x48] sm:$0xff]
    %v368 = vld [vmem:[%s357 + $0x50] sm:$0xff]
    %v369 = vld [vmem:[%s357 + $0x58] sm:$0xff]
    %v370 = vld [vmem:[%s357 + $0x60] sm:$0xff]
    %v371 = vld [vmem:[%s357 + $0x68] sm:$0xff]
    %v372 = vld [vmem:[%s357 + $0x70] sm:$0xff]
    %v373 = vld [vmem:[%s357 + $0x78] sm:$0xff]
    %v374 = vld [vmem:[%s357 + $0x80] sm:$0xff]
    %v375 = vld [vmem:[%s357 + $0x88] sm:$0xff]
    %v376 = vld [vmem:[%s357 + $0x90] sm:$0xff]
    %v377 = vld [vmem:[%s357 + $0x98] sm:$0xff]
    %v378 = vld [vmem:[%s357 + $0xa0] sm:$0xff]
    %v379 = vld [vmem:[%s357 + $0xa8] sm:$0xff]
    %v380 = vld [vmem:[%s357 + $0xb0] sm:$0xff]
    %v381 = vld [vmem:[%s357 + $0xb8] sm:$0xff]
    %v382 = vld [vmem:[%s357 + $0xc0] sm:$0xff]
    %v383 = vld [vmem:[%s357 + $0xc8] sm:$0xff]
    %v384 = vld [vmem:[%s357 + $0xd0] sm:$0xff]
    %v385 = vld [vmem:[%s357 + $0xd8] sm:$0xff]
    %v386 = vld [vmem:[%s357 + $0xe0] sm:$0xff]
    %v387 = vld [vmem:[%s357 + $0xe8] sm:$0xff]
    %v388 = vld [vmem:[%s357 + $0xf0] sm:$0xff]
    %v389 = vld [vmem:[%s357 + $0xf8] sm:$0xff]
    %390 = vmatpush.msra.mxu0 %v373
    %391 = vmatpush.msra.mxu0 %v372
    %392 = vmatpush.msra.mxu0 %v371
    %393 = vmatpush.msra.mxu0 %v370
    %394 = vmatpush.msra.mxu0 %v369
    %395 = vmatpush.msra.mxu0 %v368
    %396 = vmatpush.msra.mxu0 %v367
    %397 = vmatpush.msra.mxu0 %v366
    %398 = vmatpush.msra.mxu0 %v365
    %399 = vmatpush.msra.mxu0 %v364
    %400 = vmatpush.msra.mxu0 %v363
    %401 = vmatpush.msra.mxu0 %v362
    %402 = vmatpush.msra.mxu0 %v361
    %403 = vmatpush.msra.mxu0 %v360
    %404 = vmatpush.msra.mxu0 %v359
    %405 = vmatpush.msra.mxu0 %v358
    %406 = vmatmul.f32.gmra.mxu0 %v355
    %v407 = vpop.f32.mrf.mxu0
    %v408 = vadd.f32 0.0, %v407
    %409 = vdwg.mxu0
    %410 = vmatpush.msra.mxu0 %v389
    %411 = vmatpush.msra.mxu0 %v388
    %412 = vmatpush.msra.mxu0 %v387
    %413 = vmatpush.msra.mxu0 %v386
    %414 = vmatpush.msra.mxu0 %v385
    %415 = vmatpush.msra.mxu0 %v384
    %416 = vmatpush.msra.mxu0 %v383
    %417 = vmatpush.msra.mxu0 %v382
    %418 = vmatpush.msra.mxu0 %v381
    %419 = vmatpush.msra.mxu0 %v380
    %420 = vmatpush.msra.mxu0 %v379
    %421 = vmatpush.msra.mxu0 %v378
    %422 = vmatpush.msra.mxu0 %v377
    %423 = vmatpush.msra.mxu0 %v376
    %424 = vmatpush.msra.mxu0 %v375
    %425 = vmatpush.msra.mxu0 %v374
    %426 = vmatmul.f32.gmra.mxu0 %v356
    %v427 = vpop.f32.mrf.mxu0
    %v428 = vadd.f32 %v408, %v427
    %429 = vdwg.mxu0
    %v430 = vadd.f32 %v333, %v428
    %431 = vst [vmem:[#allocation7] sm:$0xff] %v430
    // Predicated region
    $region18: #{tpu_custom_call.1} parent=1 // pred_check
      _
    $region19: #{tpu_custom_call.1} parent=1 // pred_check_branch
      %433 = sbr.rel (0) target = $region21
    $region20: #{tpu_custom_call.1} parent=1 // pred_region
      %435 = vsyncadd [#allocation4], 0
      %s437 = sshll.u32 [#allocation7], 4
      %s438 = int_to_ptr.vmem [resolvable:$true] %s437
      %s439 = sshll.u32 %s2, 4
      %s440 = int_to_ptr.hbm [resolvable:$true] %s439
      %442 = dma.vmem_to_hbm [thread:$0]  %s438, 128, %s440, [#allocation4]
    $region21: #{tpu_custom_call.1} parent=1 // pred_fallthru
      _
    // Predicated region
    $region22: #{tpu_custom_call.1} parent=1 // pred_check
      _
    $region23: #{tpu_custom_call.1} parent=1 // pred_check_branch
      %444 = sbr.rel (0) target = $region25
    $region24: #{tpu_custom_call.1} parent=1 // pred_region
      %446 = dma.done [#allocation4], 128
    $region25: #{tpu_custom_call.1} parent=1 // pred_fallthru
      _
    %447 = vsyncpa [#allocation3], 1
    %448 = vsyncpa [#allocation6], 1
    %449 = vsyncpa [#allocation4], 1

</llo_original>
